<compile_context>
chip_gen: v6e
topology: v6e:2x2x1
jax: 0.10.0
libtpu: 0.0.40
codegen_flags: <defaults>
</compile_context>

<pallas_src>
import math

import jax
import jax.numpy as jnp
from jax.experimental import pallas as pl
from jax.experimental.pallas import tpu as pltpu


def build_layer_config(input_size, red_factor=2):
    """Replicates LinModel.__init__ layer construction logic."""
    sizes, relu = [], []
    i = input_size
    ct = 0
    while i // red_factor > 0:
        out = i // red_factor
        if i == input_size:
            use_relu = False                      # first layer: Linear only (+ optional dropout)
        elif ct % 2 == 0 and i // (red_factor * 2) > 1:
            use_relu = True                       # Linear + ReLU
        elif i // red_factor == 1:
            use_relu = False                      # final layer (-> 1): Linear only
        else:
            use_relu = True                       # Linear + ReLU
        sizes.append((i, out))
        relu.append(use_relu)
        i = out
        ct += 1
    return sizes, relu


def init_params(key, sizes):
    """Deterministic init: xavier_uniform for weights, PyTorch-default uniform for bias."""
    params = []
    for fan_in, fan_out in sizes:
        key, kw, kb = jax.random.split(key, 3)
        bw = math.sqrt(6.0 / (fan_in + fan_out))
        # stored as (in, out) == transpose of torch's (out, in) weight
        w = jax.random.uniform(kw, (fan_in, fan_out), jnp.float32, -bw, bw)
        bb = 1.0 / math.sqrt(fan_in)
        b = jax.random.uniform(kb, (1, fan_out), jnp.float32, -bb, bb)
        params.append((w, b))
    return params


def fold_first_layer(params, relu_flags):
    """Fold a ReLU-free first Linear into the next one:
       (x @ W0 + b0) @ W1 + b1 == x @ (W0 @ W1) + (b0 @ W1 + b1)."""
    if len(params) >= 2 and not relu_flags[0]:
        (w0, b0), (w1, b1) = params[0], params[1]
        hi = jax.lax.Precision.HIGHEST
        w01 = jnp.dot(w0, w1, precision=hi)
        b01 = jnp.dot(b0, w1, precision=hi) + b1
        params = [(w01, b01)] + list(params[2:])
        relu_flags = [relu_flags[1]] + list(relu_flags[2:])
    return params, relu_flags


def _round_up(v, m):
    return -(-v // m) * m


def pack_params(params, pack):
    """Block-diagonal weights / tiled biases so `pack` batch rows share one packed row."""
    if pack == 1:
        return [(w, b) for w, b in params]
    eye = jnp.eye(pack, dtype=jnp.float32)
    return [(jnp.kron(eye, w), jnp.tile(b, (1, pack))) for w, b in params]


def make_mlp_kernel(n_layers, relu_flags, precision=None):
    """Kernel ref order: x, (w0, b0, w1, b1, ...), out.  All layers run on the MXU."""

    def kernel(*refs):
        x_ref = refs[0]
        o_ref = refs[-1]
        h = x_ref[...]
        for l in range(n_layers):
            w_ref = refs[1 + 2 * l]          # (in_p, out_p)  (block-diagonal if packed)
            b_ref = refs[2 + 2 * l]          # (1, out_p)     f32
            h = jnp.dot(h.astype(w_ref.dtype), w_ref[...],
                        preferred_element_type=jnp.float32,
                        precision=precision) + b_ref[...]
            if relu_flags[l]:
                h = jnp.maximum(h, 0.0)
        o_ref[...] = h.astype(o_ref.dtype)

    return kernel


def _vmem_estimate(tbr, in_cols, layer_cols, x_itemsize):
    """Conservative VMEM bytes: double-buffered in/out tiles + lane-padded intermediates."""
    lane = 128
    est = 2 * tbr * _round_up(in_cols, lane) * x_itemsize          # x tile, double-buffered
    for c in layer_cols[:-1]:
        est += tbr * _round_up(c, lane) * 4                        # compiler scratch per layer
    est += 2 * tbr * _round_up(layer_cols[-1], lane) * 4           # out tile, double-buffered
    return est


def lin_model_forward(x, params, relu_flags, *, block_batch=8192,
                      use_bf16_inputs=False, mxu_precision=None):
    """Whole MLP chain in one pallas_call, tiled over the (packed) batch axis.

    Weights/biases are VMEM-resident (constant index_map); x/out tiles are streamed
    and double-buffered by the BlockSpec pipeline."""
    params, relu_flags = fold_first_layer(params, relu_flags)
    in_dim = params[0][0].shape[0]
    out_dim = params[-1][0].shape[1]
    batch = x.shape[0]

    # --- feature packing: (batch, in) -> (batch/p, in*p), weights -> kron(I_p, W).
    # Free row-major reshape; dense 128-lane K for the first MXU layer, p-x denser
    # intermediates/output.  p must divide batch (so no pad => no extra HBM pass).
    p_target = max(1, min(8, 128 // max(in_dim, 1)))
    pack = 1
    for cand in (8, 4, 2, 1):
        if cand <= p_target and batch % cand == 0:
            pack = cand
            break
    params_p = pack_params(params, pack)
    batch_r = batch // pack
    in_p = in_dim * pack
    out_p = out_dim * pack
    xr = x.reshape(batch_r, in_p)

    if use_bf16_inputs:
        # Halve x HBM bytes (dominant traffic); MXU takes bf16 natively, accumulation stays f32.
        # Recommended on v5e (~820 GB/s HBM); verify tolerance vs the f32 reference.
        xr = xr.astype(jnp.bfloat16)
        params_p = [(w.astype(jnp.bfloat16), b) for w, b in params_p]

    layer_cols = [w.shape[1] for w, _ in params_p]      # packed width of each layer output
    x_itemsize = jnp.dtype(xr.dtype).itemsize

    # --- batch tile: as big as fits (amortize ~0.35us/grid-step), multiple of 8 sublanes.
    tbr = max(8, block_batch // pack)
    tbr = min(tbr, _round_up(batch_r, 8))
    tbr = _round_up(tbr, 8)
    # v7x has two TensorCores splitting the "parallel" grid axis: prefer >= 2 steps.
    if pl.cdiv(batch_r, tbr) < 2 and batch_r > 16:
        tbr = _round_up(pl.cdiv(batch_r, 2), 8)
    # Keep the working set safe for v7x (64 MiB physical VMEM); shrink the tile if needed.
    while tbr > 8 and _vmem_estimate(tbr, in_p, layer_cols, x_itemsize) > (40 << 20):
        tbr = max(8, _round_up(tbr // 2, 8))
    est = _vmem_estimate(tbr, in_p, layer_cols, x_itemsize)

    compiler_kwargs = dict(dimension_semantics=("parallel",))
    if est > (12 << 20):                                 # above v5e's default scoped-VMEM comfort zone
        compiler_kwargs["vmem_limit_bytes"] = int(min(est + (8 << 20), 48 << 20))

    num_tiles = pl.cdiv(batch_r, tbr)                    # ragged last tile handled by Pallas (no pad)

    flat_args = []
    in_specs = [pl.BlockSpec((tbr, in_p), lambda i: (i, 0))]
    for w, b in params_p:
        flat_args.extend([w, b])
        in_specs.append(pl.BlockSpec(w.shape, lambda i: (0, 0)))   # VMEM-resident across grid
        in_specs.append(pl.BlockSpec(b.shape, lambda i: (0, 0)))

    kernel = make_mlp_kernel(len(params_p), relu_flags, precision=mxu_precision)
    out_packed = pl.pallas_call(
        kernel,
        out_shape=jax.ShapeDtypeStruct((batch_r, out_p), jnp.float32),
        grid=(num_tiles,),
        in_specs=in_specs,
        out_specs=pl.BlockSpec((tbr, out_p), lambda i: (i, 0)),
        compiler_params=pltpu.CompilerParams(**compiler_kwargs),
    )(xr, *flat_args)

    # Packed (batch/p, p*out) rows are exactly the row-major layout of (batch, out): free reshape.
    return out_packed.reshape(batch, out_dim)


def lin_model_reference(x, params, relu_flags):
    """Pure-JAX reference on the ORIGINAL (unfolded, unpacked) parameters."""
    hi = jax.lax.Precision.HIGHEST
    h = x
    for (w, b), r in zip(params, relu_flags):
        h = jnp.dot(h, w, precision=hi) + b
        if r:
            h = jnp.maximum(h, 0.0)
    return h


if __name__ == "__main__":
    input_size = 32
    batch = 1024          # small demo; pack=4 -> 256 packed rows -> 2 grid steps of 128

    key = jax.random.PRNGKey(0)
    key, kx = jax.random.split(key)
    x = jax.random.normal(kx, (batch, input_size), dtype=jnp.float32)

    sizes, relu_flags = build_layer_config(input_size, red_factor=2)
    params = init_params(key, sizes)

    out = lin_model_forward(x, params, relu_flags)
    out = jax.block_until_ready(out)

    ref = lin_model_reference(x, params, relu_flags)
    assert out.shape == (batch, 1), out.shape
    # Torch module is f64; the kernel uses default-precision f32 MXU passes, so the
    # tolerance is a bit looser than the HIGHEST-precision f32 reference.
    assert jnp.allclose(out, ref, atol=2e-3, rtol=2e-3), "mismatch vs reference"

    print("KERNEL_OK")
</pallas_src>

<mosaic_0001>
module attributes {stable_mosaic.version = 11 : i64} {
  func.func @kernel(%arg0: i32, %arg1: memref<128x128xf32, #tpu.memory_space<vmem>>, %arg2: memref<128x32xf32, #tpu.memory_space<vmem>>, %arg3: memref<1x32xf32, #tpu.memory_space<vmem>>, %arg4: memref<32x16xf32, #tpu.memory_space<vmem>>, %arg5: memref<1x16xf32, #tpu.memory_space<vmem>>, %arg6: memref<16x8xf32, #tpu.memory_space<vmem>>, %arg7: memref<1x8xf32, #tpu.memory_space<vmem>>, %arg8: memref<8x4xf32, #tpu.memory_space<vmem>>, %arg9: memref<1x4xf32, #tpu.memory_space<vmem>>, %arg10: memref<128x4xf32, #tpu.memory_space<vmem>>) attributes {dimension_semantics = [#tpu.dimension_semantics<parallel>], iteration_bounds = array<i64: 2>, scalar_prefetch = 0 : i64, scratch_operands = 0 : i64, tpu.core_type = #tpu.core_type<tc>, window_params = [{transform_indices = @transform_0, window_bounds = array<i64: 128, 128>}, {pipeline_mode = #tpu.pipeline_mode<synchronous>, transform_indices = @transform_1, window_bounds = array<i64: 128, 32>}, {pipeline_mode = #tpu.pipeline_mode<synchronous>, transform_indices = @transform_2, window_bounds = array<i64: 1, 32>}, {pipeline_mode = #tpu.pipeline_mode<synchronous>, transform_indices = @transform_3, window_bounds = array<i64: 32, 16>}, {pipeline_mode = #tpu.pipeline_mode<synchronous>, transform_indices = @transform_4, window_bounds = array<i64: 1, 16>}, {pipeline_mode = #tpu.pipeline_mode<synchronous>, transform_indices = @transform_5, window_bounds = array<i64: 16, 8>}, {pipeline_mode = #tpu.pipeline_mode<synchronous>, transform_indices = @transform_6, window_bounds = array<i64: 1, 8>}, {pipeline_mode = #tpu.pipeline_mode<synchronous>, transform_indices = @transform_7, window_bounds = array<i64: 8, 4>}, {pipeline_mode = #tpu.pipeline_mode<synchronous>, transform_indices = @transform_8, window_bounds = array<i64: 1, 4>}, {transform_indices = @transform_9, window_bounds = array<i64: 128, 4>}]} {
    %c0 = arith.constant 0 : index
    %c0_0 = arith.constant 0 : index
    %0 = vector.load %arg1[%c0, %c0_0] : memref<128x128xf32, #tpu.memory_space<vmem>>, vector<128x128xf32>
    %c0_1 = arith.constant 0 : index
    %c0_2 = arith.constant 0 : index
    %1 = vector.load %arg2[%c0_1, %c0_2] : memref<128x32xf32, #tpu.memory_space<vmem>>, vector<128x32xf32>
    %cst = arith.constant dense<0.000000e+00> : vector<128x32xf32>
    %2 = tpu.matmul %0, %1, %cst {dimension_numbers = #tpu.dot_dimension_numbers<[1], [0], [0], [1], [0, 0, 1, 1], [], []>} : vector<128x128xf32>, vector<128x32xf32>, vector<128x32xf32> -> vector<128x32xf32>
    %c0_3 = arith.constant 0 : index
    %c0_4 = arith.constant 0 : index
    %3 = vector.load %arg3[%c0_3, %c0_4] : memref<1x32xf32, #tpu.memory_space<vmem>>, vector<1x32xf32>
    %4 = vector.broadcast %3 : vector<1x32xf32> to vector<128x32xf32>
    %5 = arith.addf %2, %4 : vector<128x32xf32>
    %cst_5 = arith.constant 0.000000e+00 : f32
    %6 = vector.broadcast %cst_5 : f32 to vector<128x32xf32>
    %7 = arith.maximumf %5, %6 : vector<128x32xf32>
    %c0_6 = arith.constant 0 : index
    %c0_7 = arith.constant 0 : index
    %8 = vector.load %arg4[%c0_6, %c0_7] : memref<32x16xf32, #tpu.memory_space<vmem>>, vector<32x16xf32>
    %cst_8 = arith.constant dense<0.000000e+00> : vector<128x16xf32>
    %9 = tpu.matmul %7, %8, %cst_8 {dimension_numbers = #tpu.dot_dimension_numbers<[1], [0], [0], [1], [0, 0, 1, 1], [], []>} : vector<128x32xf32>, vector<32x16xf32>, vector<128x16xf32> -> vector<128x16xf32>
    %c0_9 = arith.constant 0 : index
    %c0_10 = arith.constant 0 : index
    %10 = vector.load %arg5[%c0_9, %c0_10] : memref<1x16xf32, #tpu.memory_space<vmem>>, vector<1x16xf32>
    %11 = vector.broadcast %10 : vector<1x16xf32> to vector<128x16xf32>
    %12 = arith.addf %9, %11 : vector<128x16xf32>
    %cst_11 = arith.constant 0.000000e+00 : f32
    %13 = vector.broadcast %cst_11 : f32 to vector<128x16xf32>
    %14 = arith.maximumf %12, %13 : vector<128x16xf32>
    %c0_12 = arith.constant 0 : index
    %c0_13 = arith.constant 0 : index
    %15 = vector.load %arg6[%c0_12, %c0_13] : memref<16x8xf32, #tpu.memory_space<vmem>>, vector<16x8xf32>
    %cst_14 = arith.constant dense<0.000000e+00> : vector<128x8xf32>
    %16 = tpu.matmul %14, %15, %cst_14 {dimension_numbers = #tpu.dot_dimension_numbers<[1], [0], [0], [1], [0, 0, 1, 1], [], []>} : vector<128x16xf32>, vector<16x8xf32>, vector<128x8xf32> -> vector<128x8xf32>
    %c0_15 = arith.constant 0 : index
    %c0_16 = arith.constant 0 : index
    %17 = vector.load %arg7[%c0_15, %c0_16] : memref<1x8xf32, #tpu.memory_space<vmem>>, vector<1x8xf32>
    %18 = vector.broadcast %17 : vector<1x8xf32> to vector<128x8xf32>
    %19 = arith.addf %16, %18 : vector<128x8xf32>
    %cst_17 = arith.constant 0.000000e+00 : f32
    %20 = vector.broadcast %cst_17 : f32 to vector<128x8xf32>
    %21 = arith.maximumf %19, %20 : vector<128x8xf32>
    %c0_18 = arith.constant 0 : index
    %c0_19 = arith.constant 0 : index
    %22 = vector.load %arg8[%c0_18, %c0_19] : memref<8x4xf32, #tpu.memory_space<vmem>>, vector<8x4xf32>
    %cst_20 = arith.constant dense<0.000000e+00> : vector<128x4xf32>
    %23 = tpu.matmul %21, %22, %cst_20 {dimension_numbers = #tpu.dot_dimension_numbers<[1], [0], [0], [1], [0, 0, 1, 1], [], []>} : vector<128x8xf32>, vector<8x4xf32>, vector<128x4xf32> -> vector<128x4xf32>
    %c0_21 = arith.constant 0 : index
    %c0_22 = arith.constant 0 : index
    %24 = vector.load %arg9[%c0_21, %c0_22] : memref<1x4xf32, #tpu.memory_space<vmem>>, vector<1x4xf32>
    %25 = vector.broadcast %24 : vector<1x4xf32> to vector<128x4xf32>
    %26 = arith.addf %23, %25 : vector<128x4xf32>
    %c0_23 = arith.constant 0 : index
    %c0_24 = arith.constant 0 : index
    %27 = vector.load %arg10[%c0_23, %c0_24] : memref<128x4xf32, #tpu.memory_space<vmem>>, vector<128x4xf32>
    tpu.vector_store %arg10[%c0_23, %c0_24], %26 {strides = array<i32>} : memref<128x4xf32, #tpu.memory_space<vmem>>, vector<128x4xf32>,
    return
  }
  func.func @transform_0(%arg0: i32) -> (i32, i32) {
    %c0_i32 = arith.constant 0 : i32
    %c0_i32_0 = arith.constant 0 : i32
    return %arg0, %c0_i32 : i32, i32
  }
  func.func @transform_1(%arg0: i32) -> (i32, i32) {
    %c0_i32 = arith.constant 0 : i32
    %c0_i32_0 = arith.constant 0 : i32
    %c0_i32_1 = arith.constant 0 : i32
    return %c0_i32, %c0_i32_0 : i32, i32
  }
  func.func @transform_2(%arg0: i32) -> (i32, i32) {
    %c0_i32 = arith.constant 0 : i32
    %c0_i32_0 = arith.constant 0 : i32
    %c0_i32_1 = arith.constant 0 : i32
    return %c0_i32, %c0_i32_0 : i32, i32
  }
  func.func @transform_3(%arg0: i32) -> (i32, i32) {
    %c0_i32 = arith.constant 0 : i32
    %c0_i32_0 = arith.constant 0 : i32
    %c0_i32_1 = arith.constant 0 : i32
    return %c0_i32, %c0_i32_0 : i32, i32
  }
  func.func @transform_4(%arg0: i32) -> (i32, i32) {
    %c0_i32 = arith.constant 0 : i32
    %c0_i32_0 = arith.constant 0 : i32
    %c0_i32_1 = arith.constant 0 : i32
    return %c0_i32, %c0_i32_0 : i32, i32
  }
  func.func @transform_5(%arg0: i32) -> (i32, i32) {
    %c0_i32 = arith.constant 0 : i32
    %c0_i32_0 = arith.constant 0 : i32
    %c0_i32_1 = arith.constant 0 : i32
    return %c0_i32, %c0_i32_0 : i32, i32
  }
  func.func @transform_6(%arg0: i32) -> (i32, i32) {
    %c0_i32 = arith.constant 0 : i32
    %c0_i32_0 = arith.constant 0 : i32
    %c0_i32_1 = arith.constant 0 : i32
    return %c0_i32, %c0_i32_0 : i32, i32
  }
  func.func @transform_7(%arg0: i32) -> (i32, i32) {
    %c0_i32 = arith.constant 0 : i32
    %c0_i32_0 = arith.constant 0 : i32
    %c0_i32_1 = arith.constant 0 : i32
    return %c0_i32, %c0_i32_0 : i32, i32
  }
  func.func @transform_8(%arg0: i32) -> (i32, i32) {
    %c0_i32 = arith.constant 0 : i32
    %c0_i32_0 = arith.constant 0 : i32
    %c0_i32_1 = arith.constant 0 : i32
    return %c0_i32, %c0_i32_0 : i32, i32
  }
  func.func @transform_9(%arg0: i32) -> (i32, i32) {
    %c0_i32 = arith.constant 0 : i32
    %c0_i32_0 = arith.constant 0 : i32
    return %arg0, %c0_i32 : i32, i32
  }
}

</mosaic_0001>

<llo_original>
// kernel: tpu_custom_call.1
$region0: #{tpu_custom_call.1}
  #allocation0 [shape = 'u32[]', space=smem, size = 0x4, offset = 0x4, fixed_abs, tag = 'smem constant byte address 0x4 - core index']
  #allocation1 [shape = 'u32[144,128]{1,0:T(1,128)}', space=vmem, size = 0x12000, scoped, tag = 'internal scratch']
  %s0 = inlined_call_operand.hbm [shape: f32[256,128], index: 0, kind: input, shape index: {}]
  %s1 = inlined_call_operand.vmem [shape: f32[128,32], index: 1, kind: input, shape index: {}]
  %s2 = inlined_call_operand.vmem [shape: f32[1,32], index: 2, kind: input, shape index: {}]
  %s3 = inlined_call_operand.vmem [shape: f32[32,16], index: 3, kind: input, shape index: {}]
  %s4 = inlined_call_operand.vmem [shape: f32[1,16], index: 4, kind: input, shape index: {}]
  %s5 = inlined_call_operand.vmem [shape: f32[16,8], index: 5, kind: input, shape index: {}]
  %s6 = inlined_call_operand.vmem [shape: f32[1,8], index: 6, kind: input, shape index: {}]
  %s7 = inlined_call_operand.vmem [shape: f32[8,4], index: 7, kind: input, shape index: {}]
  %s8 = inlined_call_operand.vmem [shape: f32[1,4], index: 8, kind: input, shape index: {}]
  %s9 = inlined_call_operand.vmem [shape: f32[256,4], index: 9, kind: output, shape index: {}]
  %s10 = sld [smem:[#allocation0]]
  $region73: #{tpu_custom_call.1} parent=0
    _
  %s12 = ssub.s32 1, %s10
  %s13 = scalar_select 0, %s12, %s10
  $region1: #{tpu_custom_call.1} parent=0
    #allocation2 [shape = 'u8[131072]{0}', space=vmem, size = 0x20000, scoped, tag = 'input window, operand 0']
    #allocation3 [shape = 's32[2]{0}', space=sflag, size = 0x8, scoped, tag = 'scoped memory for tpu_custom_call.1']
    %14 = vsyncpa [#allocation3], 0
    %s15 = scalar_lea.sflag [#allocation3], 1
    %16 = vsyncpa %s15, 0
    loop: start=0, step=1, limit=4
    $region2: #{tpu_custom_call.1} parent=1 // loop_pre_header
      _
    $region3: #{tpu_custom_call.1} parent=1 // loop_header
      %s18 = sphi 0, %s22
      %p19 = scmp.ge.s32.totalorder %s18, 4
      %s28 = sphi 0, %s30
      %s31 = sphi 0, %s28
      %s32 = sphi 0, %s31
      %s48 = sphi 0, %s32
      %s52 = sphi 0, %s52
      %s54 = sphi 0, %s52
      %s55 = sphi 0, %s54
      %s69 = sphi 0, %s55
      %s73 = sphi 0, %s73
      %s75 = sphi 0, %s73
      %s76 = sphi 0, %s75
      %s90 = sphi 0, %s76
      %s94 = sphi 0, %s94
      %s96 = sphi 0, %s94
      %s97 = sphi 0, %s96
      %s111 = sphi 0, %s97
      %s115 = sphi 0, %s115
      %s117 = sphi 0, %s115
      %s118 = sphi 0, %s117
      %s132 = sphi 0, %s118
      %s136 = sphi 0, %s136
      %s138 = sphi 0, %s136
      %s139 = sphi 0, %s138
      %s153 = sphi 0, %s139
      %s157 = sphi 0, %s157
      %s159 = sphi 0, %s157
      %s160 = sphi 0, %s159
      %s174 = sphi 0, %s160
      %s178 = sphi 0, %s178
      %s180 = sphi 0, %s178
      %s181 = sphi 0, %s180
      %s195 = sphi 0, %s181
      %s199 = sphi 0, %s199
      %s201 = sphi 0, %s199
      %s202 = sphi 0, %s201
      %s216 = sphi 0, %s202
      %s222 = sphi 0, %s224
      %s225 = sphi 0, %s222
      %s226 = sphi 0, %s225
      %s242 = sphi 0, %s226
    $region4: #{tpu_custom_call.1} parent=1 // loop_header_branch
      %21 = sbr.rel (%p19) target = $region8
    $region5: #{tpu_custom_call.1} parent=1 // loop_body
      %s23 = ssub.s32 %s18, 1
      %s24 = ssub.s32 %s18, 2
      %s25 = sadd.s32 %s18, 1
      %s26 = ssub.s32 %s18, %s25
      %p27 = scmp.eq.s32.totalorder %s26, 0
      %s29 = sadd.s32 %s28, 1
      %s30 = scalar_select %p27, %s28, %s29
      %p33 = pneg %p27
      %p34 = scmp.eq.s32.totalorder %s18, 1
      %p35 = por %p33, %p34
      %p36 = scmp.ne.s32.totalorder %s28, %s31
      %p37 = scmp.eq.s32.totalorder %s18, 0
      %p38 = por %p36, %p37
      %p39 = scmp.ne.s32.totalorder %s28, %s31
      %p40 = scmp.eq.s32.totalorder %s23, 1
      %p41 = por %p39, %p40
      %p42 = scmp.ne.s32.totalorder %s31, %s32
      %p43 = scmp.eq.s32.totalorder %s23, 0
      %p44 = por %p42, %p43
      %p45 = scmp.ne.s32.totalorder %s31, %s32
      %p46 = scmp.eq.s32.totalorder %s24, 1
      %p47 = por %p45, %p46
      %p49 = scmp.ne.s32.totalorder %s32, %s48
      %p50 = scmp.eq.s32.totalorder %s24, 0
      %p51 = por %p49, %p50
      %s53 = sadd.s32 %s52, 1
      %p56 = scmp.eq.s32.totalorder %s18, 1
      %p57 = scmp.ne.s32.totalorder %s52, %s54
      %p58 = scmp.eq.s32.totalorder %s18, 0
      %p59 = por %p57, %p58
      %p60 = scmp.ne.s32.totalorder %s52, %s54
      %p61 = scmp.eq.s32.totalorder %s23, 1
      %p62 = por %p60, %p61
      %p63 = scmp.ne.s32.totalorder %s54, %s55
      %p64 = scmp.eq.s32.totalorder %s23, 0
      %p65 = por %p63, %p64
      %p66 = scmp.ne.s32.totalorder %s54, %s55
      %p67 = scmp.eq.s32.totalorder %s24, 1
      %p68 = por %p66, %p67
      %p70 = scmp.ne.s32.totalorder %s55, %s69
      %p71 = scmp.eq.s32.totalorder %s24, 0
      %p72 = por %p70, %p71
      %s74 = sadd.s32 %s73, 1
      %p77 = scmp.eq.s32.totalorder %s18, 1
      %p78 = scmp.ne.s32.totalorder %s73, %s75
      %p79 = scmp.eq.s32.totalorder %s18, 0
      %p80 = por %p78, %p79
      %p81 = scmp.ne.s32.totalorder %s73, %s75
      %p82 = scmp.eq.s32.totalorder %s23, 1
      %p83 = por %p81, %p82
      %p84 = scmp.ne.s32.totalorder %s75, %s76
      %p85 = scmp.eq.s32.totalorder %s23, 0
      %p86 = por %p84, %p85
      %p87 = scmp.ne.s32.totalorder %s75, %s76
      %p88 = scmp.eq.s32.totalorder %s24, 1
      %p89 = por %p87, %p88
      %p91 = scmp.ne.s32.totalorder %s76, %s90
      %p92 = scmp.eq.s32.totalorder %s24, 0
      %p93 = por %p91, %p92
      %s95 = sadd.s32 %s94, 1
      %p98 = scmp.eq.s32.totalorder %s18, 1
      %p99 = scmp.ne.s32.totalorder %s94, %s96
      %p100 = scmp.eq.s32.totalorder %s18, 0
      %p101 = por %p99, %p100
      %p102 = scmp.ne.s32.totalorder %s94, %s96
      %p103 = scmp.eq.s32.totalorder %s23, 1
      %p104 = por %p102, %p103
      %p105 = scmp.ne.s32.totalorder %s96, %s97
      %p106 = scmp.eq.s32.totalorder %s23, 0
      %p107 = por %p105, %p106
      %p108 = scmp.ne.s32.totalorder %s96, %s97
      %p109 = scmp.eq.s32.totalorder %s24, 1
      %p110 = por %p108, %p109
      %p112 = scmp.ne.s32.totalorder %s97, %s111
      %p113 = scmp.eq.s32.totalorder %s24, 0
      %p114 = por %p112, %p113
      %s116 = sadd.s32 %s115, 1
      %p119 = scmp.eq.s32.totalorder %s18, 1
      %p120 = scmp.ne.s32.totalorder %s115, %s117
      %p121 = scmp.eq.s32.totalorder %s18, 0
      %p122 = por %p120, %p121
      %p123 = scmp.ne.s32.totalorder %s115, %s117
      %p124 = scmp.eq.s32.totalorder %s23, 1
      %p125 = por %p123, %p124
      %p126 = scmp.ne.s32.totalorder %s117, %s118
      %p127 = scmp.eq.s32.totalorder %s23, 0
      %p128 = por %p126, %p127
      %p129 = scmp.ne.s32.totalorder %s117, %s118
      %p130 = scmp.eq.s32.totalorder %s24, 1
      %p131 = por %p129, %p130
      %p133 = scmp.ne.s32.totalorder %s118, %s132
      %p134 = scmp.eq.s32.totalorder %s24, 0
      %p135 = por %p133, %p134
      %s137 = sadd.s32 %s136, 1
      %p140 = scmp.eq.s32.totalorder %s18, 1
      %p141 = scmp.ne.s32.totalorder %s136, %s138
      %p142 = scmp.eq.s32.totalorder %s18, 0
      %p143 = por %p141, %p142
      %p144 = scmp.ne.s32.totalorder %s136, %s138
      %p145 = scmp.eq.s32.totalorder %s23, 1
      %p146 = por %p144, %p145
      %p147 = scmp.ne.s32.totalorder %s138, %s139
      %p148 = scmp.eq.s32.totalorder %s23, 0
      %p149 = por %p147, %p148
      %p150 = scmp.ne.s32.totalorder %s138, %s139
      %p151 = scmp.eq.s32.totalorder %s24, 1
      %p152 = por %p150, %p151
      %p154 = scmp.ne.s32.totalorder %s139, %s153
      %p155 = scmp.eq.s32.totalorder %s24, 0
      %p156 = por %p154, %p155
      %s158 = sadd.s32 %s157, 1
      %p161 = scmp.eq.s32.totalorder %s18, 1
      %p162 = scmp.ne.s32.totalorder %s157, %s159
      %p163 = scmp.eq.s32.totalorder %s18, 0
      %p164 = por %p162, %p163
      %p165 = scmp.ne.s32.totalorder %s157, %s159
      %p166 = scmp.eq.s32.totalorder %s23, 1
      %p167 = por %p165, %p166
      %p168 = scmp.ne.s32.totalorder %s159, %s160
      %p169 = scmp.eq.s32.totalorder %s23, 0
      %p170 = por %p168, %p169
      %p171 = scmp.ne.s32.totalorder %s159, %s160
      %p172 = scmp.eq.s32.totalorder %s24, 1
      %p173 = por %p171, %p172
      %p175 = scmp.ne.s32.totalorder %s160, %s174
      %p176 = scmp.eq.s32.totalorder %s24, 0
      %p177 = por %p175, %p176
      %s179 = sadd.s32 %s178, 1
      %p182 = scmp.eq.s32.totalorder %s18, 1
      %p183 = scmp.ne.s32.totalorder %s178, %s180
      %p184 = scmp.eq.s32.totalorder %s18, 0
      %p185 = por %p183, %p184
      %p186 = scmp.ne.s32.totalorder %s178, %s180
      %p187 = scmp.eq.s32.totalorder %s23, 1
      %p188 = por %p186, %p187
      %p189 = scmp.ne.s32.totalorder %s180, %s181
      %p190 = scmp.eq.s32.totalorder %s23, 0
      %p191 = por %p189, %p190
      %p192 = scmp.ne.s32.totalorder %s180, %s181
      %p193 = scmp.eq.s32.totalorder %s24, 1
      %p194 = por %p192, %p193
      %p196 = scmp.ne.s32.totalorder %s181, %s195
      %p197 = scmp.eq.s32.totalorder %s24, 0
      %p198 = por %p196, %p197
      %s200 = sadd.s32 %s199, 1
      %p203 = scmp.eq.s32.totalorder %s18, 1
      %p204 = scmp.ne.s32.totalorder %s199, %s201
      %p205 = scmp.eq.s32.totalorder %s18, 0
      %p206 = por %p204, %p205
      %p207 = scmp.ne.s32.totalorder %s199, %s201
      %p208 = scmp.eq.s32.totalorder %s23, 1
      %p209 = por %p207, %p208
      %p210 = scmp.ne.s32.totalorder %s201, %s202
      %p211 = scmp.eq.s32.totalorder %s23, 0
      %p212 = por %p210, %p211
      %p213 = scmp.ne.s32.totalorder %s201, %s202
      %p214 = scmp.eq.s32.totalorder %s24, 1
      %p215 = por %p213, %p214
      %p217 = scmp.ne.s32.totalorder %s202, %s216
      %p218 = scmp.eq.s32.totalorder %s24, 0
      %p219 = por %p217, %p218
      %s220 = ssub.s32 %s18, %s25
      %p221 = scmp.eq.s32.totalorder %s220, 0
      %s223 = sadd.s32 %s222, 1
      %s224 = scalar_select %p221, %s222, %s223
      %p227 = pneg %p221
      %p228 = scmp.eq.s32.totalorder %s18, 1
      %p229 = por %p227, %p228
      %p230 = scmp.ne.s32.totalorder %s222, %s225
      %p231 = scmp.eq.s32.totalorder %s18, 0
      %p232 = por %p230, %p231
      %p233 = scmp.ne.s32.totalorder %s222, %s225
      %p234 = scmp.eq.s32.totalorder %s23, 1
      %p235 = por %p233, %p234
      %p236 = scmp.ne.s32.totalorder %s225, %s226
      %p237 = scmp.eq.s32.totalorder %s23, 0
      %p238 = por %p236, %p237
      %p239 = scmp.ne.s32.totalorder %s225, %s226
      %p240 = scmp.eq.s32.totalorder %s24, 1
      %p241 = por %p239, %p240
      %p243 = scmp.ne.s32.totalorder %s226, %s242
      %p244 = scmp.eq.s32.totalorder %s24, 0
      %p245 = por %p243, %p244
      %p246 = scmp.le.s32.totalorder 1, %s18
      %p247 = scmp.lt.s32.totalorder %s18, 3
      %p248 = pnand %p246, %p247
      %p249 = pneg %p248
      // Predicated region
      $region9: #{tpu_custom_call.1} parent=5 // pred_check
        _
      $region10: #{tpu_custom_call.1} parent=5 // pred_check_branch
        %251 = sbr.rel (%p248) target = $region12
      $region11: #{tpu_custom_call.1} parent=5 // pred_region
        %s252 = ssub.s32 %s18, 1
        // Predicated region
        $region13: #{tpu_custom_call.1} parent=11 // pred_check
          %p253 = pneg %p65
        $region14: #{tpu_custom_call.1} parent=11 // pred_check_branch
          %255 = sbr.rel (%p253) target = $region16
        $region15: #{tpu_custom_call.1} parent=11 // pred_region
          _
        $region16: #{tpu_custom_call.1} parent=11 // pred_fallthru
          _
        // Predicated region
        $region17: #{tpu_custom_call.1} parent=11 // pred_check
          %p256 = pneg %p86
        $region18: #{tpu_custom_call.1} parent=11 // pred_check_branch
          %258 = sbr.rel (%p256) target = $region20
        $region19: #{tpu_custom_call.1} parent=11 // pred_region
          _
        $region20: #{tpu_custom_call.1} parent=11 // pred_fallthru
          _
        // Predicated region
        $region21: #{tpu_custom_call.1} parent=11 // pred_check
          %p259 = pneg %p107
        $region22: #{tpu_custom_call.1} parent=11 // pred_check_branch
          %261 = sbr.rel (%p259) target = $region24
        $region23: #{tpu_custom_call.1} parent=11 // pred_region
          _
        $region24: #{tpu_custom_call.1} parent=11 // pred_fallthru
          _
        // Predicated region
        $region25: #{tpu_custom_call.1} parent=11 // pred_check
          %p262 = pneg %p128
        $region26: #{tpu_custom_call.1} parent=11 // pred_check_branch
          %264 = sbr.rel (%p262) target = $region28
        $region27: #{tpu_custom_call.1} parent=11 // pred_region
          _
        $region28: #{tpu_custom_call.1} parent=11 // pred_fallthru
          _
        // Predicated region
        $region29: #{tpu_custom_call.1} parent=11 // pred_check
          %p265 = pneg %p149
        $region30: #{tpu_custom_call.1} parent=11 // pred_check_branch
          %267 = sbr.rel (%p265) target = $region32
        $region31: #{tpu_custom_call.1} parent=11 // pred_region
          _
        $region32: #{tpu_custom_call.1} parent=11 // pred_fallthru
          _
        // Predicated region
        $region33: #{tpu_custom_call.1} parent=11 // pred_check
          %p268 = pneg %p170
        $region34: #{tpu_custom_call.1} parent=11 // pred_check_branch
          %270 = sbr.rel (%p268) target = $region36
        $region35: #{tpu_custom_call.1} parent=11 // pred_region
          _
        $region36: #{tpu_custom_call.1} parent=11 // pred_fallthru
          _
        // Predicated region
        $region37: #{tpu_custom_call.1} parent=11 // pred_check
          %p271 = pneg %p191
        $region38: #{tpu_custom_call.1} parent=11 // pred_check_branch
          %273 = sbr.rel (%p271) target = $region40
        $region39: #{tpu_custom_call.1} parent=11 // pred_region
          _
        $region40: #{tpu_custom_call.1} parent=11 // pred_fallthru
          _
        // Predicated region
        $region41: #{tpu_custom_call.1} parent=11 // pred_check
          %p274 = pneg %p212
        $region42: #{tpu_custom_call.1} parent=11 // pred_check_branch
          %276 = sbr.rel (%p274) target = $region44
        $region43: #{tpu_custom_call.1} parent=11 // pred_region
          _
        $region44: #{tpu_custom_call.1} parent=11 // pred_fallthru
          _
      $region12: #{tpu_custom_call.1} parent=5 // pred_fallthru
        _
      %p277 = scmp.lt.s32.totalorder %s18, 2
      // Predicated region
      $region45: #{tpu_custom_call.1} parent=5 // pred_check
        %p278 = pneg %p277
      $region46: #{tpu_custom_call.1} parent=5 // pred_check_branch
        %280 = sbr.rel (%p278) target = $region48
      $region47: #{tpu_custom_call.1} parent=5 // pred_region
        // Predicated region
        $region49: #{tpu_custom_call.1} parent=47 // pred_check
          %p281 = pneg %p38
        $region50: #{tpu_custom_call.1} parent=47 // pred_check_branch
          %283 = sbr.rel (%p281) target = $region52
        $region51: #{tpu_custom_call.1} parent=47 // pred_region
          %s284 = sand.u32 %s28, 1
          %s285 = scalar_lea.sflag [#allocation3], %s284
          %s286 = sand.u32 %s28, 1
          %s287 = smul.addr %s286, 128
          %s288 = scalar_lea.vmem [#allocation2], %s287
          %s289 = smul.u32 16, %s18
          %s291 = ssub.s32 2048, 2048
          %292 = vsyncadd %s285, %s291
          %s293 = smul.addr %s289, 128
          %s294 = scalar_lea.hbm %s0, %s293
          %s295 = sshll.u32 %s288, 4
          %s296 = int_to_ptr.vmem [resolvable:$true] %s295
          %301 = dma.hbm_to_vmem [thread:$0]  %s294, 2048, %s296, %s285, 128, 128, 8
        $region52: #{tpu_custom_call.1} parent=47 // pred_fallthru
          _
      $region48: #{tpu_custom_call.1} parent=5 // pred_fallthru
        _
      %p302 = scmp.le.s32.totalorder 1, %s18
      %p303 = scmp.lt.s32.totalorder %s18, 3
      %p304 = pnand %p302, %p303
      %p305 = pneg %p304
      // Predicated region
      $region53: #{tpu_custom_call.1} parent=5 // pred_check
        _
      $region54: #{tpu_custom_call.1} parent=5 // pred_check_branch
        %307 = sbr.rel (%p304) target = $region56
      $region55: #{tpu_custom_call.1} parent=5 // pred_region
        %s308 = ssub.s32 %s18, 1
        %s309 = sand.u32 %s31, 1
        %s310 = scalar_lea.sflag [#allocation3], %s309
        %s311 = sand.u32 %s31, 1
        %s312 = smul.addr %s311, 128
        %s313 = scalar_lea.vmem [#allocation2], %s312
        // Predicated region
        $region57: #{tpu_custom_call.1} parent=55 // pred_check
          %p314 = pneg %p44
        $region58: #{tpu_custom_call.1} parent=55 // pred_check_branch
          %316 = sbr.rel (%p314) target = $region60
        $region59: #{tpu_custom_call.1} parent=55 // pred_region
          %317 = dma.done %s310, 2048
        $region60: #{tpu_custom_call.1} parent=55 // pred_fallthru
          _
        %s318 = sand.u32 %s31, 1
        %s319 = scalar_lea.sflag [#allocation3], %s318
        %s320 = sand.u32 %s31, 1
        %s321 = smul.addr %s320, 128
        %s322 = scalar_lea.vmem [#allocation2], %s321
        %p323 = pneg %p44
        %p324 = pneg %p41
        %p325 = pneg %p65
        %p326 = pneg %p62
        %p327 = pneg %p86
        %p328 = pneg %p83
        %p329 = pneg %p107
        %p330 = pneg %p104
        %p331 = pneg %p128
        %p332 = pneg %p125
        %p333 = pneg %p149
        %p334 = pneg %p146
        %p335 = pneg %p170
        %p336 = pneg %p167
        %p337 = pneg %p191
        %p338 = pneg %p188
        %p339 = pneg %p212
        %p340 = pneg %p209
        %p341 = pneg %p238
        %p342 = pneg %p235
        %s343 = smul.u32 16, %s23
        %p344 = scmp.lt.s32.totalorder %s343, 31
        %s345 = scalar_select %p344, %s343, 31
        %s346 = smul.addr %s345, 8
        %s347 = scalar_lea.vmem %s9, %s346
        %s348 = smul.u32 16, %s23
        %s349 = smul.u32 16, %s23
        %p350 = scmp.lt.s32.totalorder %s349, 31
        %s351 = scalar_select %p350, %s349, 31
        %s352 = smul.addr %s351, 8
        %s353 = scalar_lea.vmem %s9, %s352
        %s354 = smul.u32 16, %s23
        %v355 = vld [vmem:[%s313] sm:$0xff]
        %v356 = vld [vmem:[%s313 + $0x8] sm:$0xff]
        %v357 = vld [vmem:[%s313 + $0x10] sm:$0xff]
        %v358 = vld [vmem:[%s313 + $0x18] sm:$0xff]
        %v359 = vld [vmem:[%s313 + $0x20] sm:$0xff]
        %v360 = vld [vmem:[%s313 + $0x28] sm:$0xff]
        %v361 = vld [vmem:[%s313 + $0x30] sm:$0xff]
        %v362 = vld [vmem:[%s313 + $0x38] sm:$0xff]
        %v363 = vld [vmem:[%s313 + $0x40] sm:$0xff]
        %v364 = vld [vmem:[%s313 + $0x48] sm:$0xff]
        %v365 = vld [vmem:[%s313 + $0x50] sm:$0xff]
        %v366 = vld [vmem:[%s313 + $0x58] sm:$0xff]
        %v367 = vld [vmem:[%s313 + $0x60] sm:$0xff]
        %v368 = vld [vmem:[%s313 + $0x68] sm:$0xff]
        %v369 = vld [vmem:[%s313 + $0x70] sm:$0xff]
        %v370 = vld [vmem:[%s313 + $0x78] sm:$0xff]
        %v371 = vld [vmem:[%s1] sm:$0xff]
        %v372 = vld [vmem:[%s1 + $0x8] sm:$0xff]
        %v373 = vld [vmem:[%s1 + $0x10] sm:$0xff]
        %v374 = vld [vmem:[%s1 + $0x18] sm:$0xff]
        %v375 = vld [vmem:[%s1 + $0x20] sm:$0xff]
        %v376 = vld [vmem:[%s1 + $0x28] sm:$0xff]
        %v377 = vld [vmem:[%s1 + $0x30] sm:$0xff]
        %v378 = vld [vmem:[%s1 + $0x38] sm:$0xff]
        %v379 = vld [vmem:[%s1 + $0x40] sm:$0xff]
        %v380 = vld [vmem:[%s1 + $0x48] sm:$0xff]
        %v381 = vld [vmem:[%s1 + $0x50] sm:$0xff]
        %v382 = vld [vmem:[%s1 + $0x58] sm:$0xff]
        %v383 = vld [vmem:[%s1 + $0x60] sm:$0xff]
        %v384 = vld [vmem:[%s1 + $0x68] sm:$0xff]
        %v385 = vld [vmem:[%s1 + $0x70] sm:$0xff]
        %v386 = vld [vmem:[%s1 + $0x78] sm:$0xff]
        %v387 = vld [vmem:[%s2] sm:$0x1]
        %v389 = vlaneseq
        %v390 = vshrl.u32 %v389, 7
        %v391 = vsub.s32 0, %v390
        %v392 = vrot.slane %v387, %v391
        %394 = vmatprep.subr.mxu0 0.0
        %395 = vmatpush1.msra.mxu0 %v386
        %396 = vmatprep.subr.mxu0 0.0
        %397 = vmatpush1.msra.mxu0 %v385
        %398 = vmatprep.subr.mxu0 0.0
        %399 = vmatpush1.msra.mxu0 %v384
        %400 = vmatprep.subr.mxu0 0.0
        %401 = vmatpush1.msra.mxu0 %v383
        %402 = vmatprep.subr.mxu0 0.0
        %403 = vmatpush1.msra.mxu0 %v382
        %404 = vmatprep.subr.mxu0 0.0
        %405 = vmatpush1.msra.mxu0 %v381
        %406 = vmatprep.subr.mxu0 0.0
        %407 = vmatpush1.msra.mxu0 %v380
        %408 = vmatprep.subr.mxu0 0.0
        %409 = vmatpush1.msra.mxu0 %v379
        %410 = vmatprep.subr.mxu0 0.0
        %411 = vmatpush1.msra.mxu0 %v378
        %412 = vmatprep.subr.mxu0 0.0
        %413 = vmatpush1.msra.mxu0 %v377
        %414 = vmatprep.subr.mxu0 0.0
        %415 = vmatpush1.msra.mxu0 %v376
        %416 = vmatprep.subr.mxu0 0.0
        %417 = vmatpush1.msra.mxu0 %v375
        %418 = vmatprep.subr.mxu0 0.0
        %419 = vmatpush1.msra.mxu0 %v374
        %420 = vmatprep.subr.mxu0 0.0
        %421 = vmatpush1.msra.mxu0 %v373
        %422 = vmatprep.subr.mxu0 0.0
        %423 = vmatpush1.msra.mxu0 %v372
        %424 = vmatprep.subr.mxu0 0.0
        %425 = vmatpush1.msra.mxu0 %v371
        %426 = vmatprep.subr.mxu0 0.0
        %427 = vmatpush2.msra.mxu0 0.0
        %428 = vmatprep.subr.mxu0 0.0
        %429 = vmatpush2.msra.mxu0 0.0
        %430 = vmatprep.subr.mxu0 0.0
        %431 = vmatpush2.msra.mxu0 0.0
        %432 = vmatprep.subr.mxu0 0.0
        %433 = vmatpush2.msra.mxu0 0.0
        %434 = vmatprep.subr.mxu0 0.0
        %435 = vmatpush2.msra.mxu0 0.0
        %436 = vmatprep.subr.mxu0 0.0
        %437 = vmatpush2.msra.mxu0 0.0
        %438 = vmatprep.subr.mxu0 0.0
        %439 = vmatpush2.msra.mxu0 0.0
        %440 = vmatprep.subr.mxu0 0.0
        %441 = vmatpush2.msra.mxu0 0.0
        %442 = vmatprep.subr.mxu0 0.0
        %443 = vmatpush2.msra.mxu0 0.0
        %444 = vmatprep.subr.mxu0 0.0
        %445 = vmatpush2.msra.mxu0 0.0
        %446 = vmatprep.subr.mxu0 0.0
        %447 = vmatpush2.msra.mxu0 0.0
        %448 = vmatprep.subr.mxu0 0.0
        %449 = vmatpush2.msra.mxu0 0.0
        %450 = vmatprep.subr.mxu0 0.0
        %451 = vmatpush2.msra.mxu0 0.0
        %452 = vmatprep.subr.mxu0 0.0
        %453 = vmatpush2.msra.mxu0 0.0
        %454 = vmatprep.subr.mxu0 0.0
        %455 = vmatpush2.msra.mxu0 0.0
        %456 = vmatprep.subr.mxu0 0.0
        %457 = vmatpush2.msra.mxu0 0.0
        %458 = vmatprep.mubr.f32.mxu0 0.0
        %459 = vmatmul.mubr.f32.gmra.mxu0 %v355
        %v460 = vpop.f32.mrf.mxu0
        %v461 = vadd.f32 %v392, %v460
        %v462 = vpop.f32.mrf.mxu0
        %463 = vmatprep.mubr.f32.mxu0 0.0
        %464 = vmatmul.mubr.f32.gmra.mxu0 %v356
        %v465 = vpop.f32.mrf.mxu0
        %v466 = vadd.f32 %v392, %v465
        %v467 = vpop.f32.mrf.mxu0
        %468 = vmatprep.mubr.f32.mxu0 0.0
        %469 = vmatmul.mubr.f32.gmra.mxu0 %v357
        %v470 = vpop.f32.mrf.mxu0
        %v471 = vadd.f32 %v392, %v470
        %v472 = vpop.f32.mrf.mxu0
        %473 = vmatprep.mubr.f32.mxu0 0.0
        %474 = vmatmul.mubr.f32.gmra.mxu0 %v358
        %v475 = vpop.f32.mrf.mxu0
        %v476 = vadd.f32 %v392, %v475
        %v477 = vpop.f32.mrf.mxu0
        %478 = vmatprep.mubr.f32.mxu0 0.0
        %479 = vmatmul.mubr.f32.gmra.mxu0 %v359
        %v480 = vpop.f32.mrf.mxu0
        %v481 = vadd.f32 %v392, %v480
        %v482 = vpop.f32.mrf.mxu0
        %483 = vmatprep.mubr.f32.mxu0 0.0
        %484 = vmatmul.mubr.f32.gmra.mxu0 %v360
        %v485 = vpop.f32.mrf.mxu0
        %v486 = vadd.f32 %v392, %v485
        %v487 = vpop.f32.mrf.mxu0
        %488 = vmatprep.mubr.f32.mxu0 0.0
        %489 = vmatmul.mubr.f32.gmra.mxu0 %v361
        %v490 = vpop.f32.mrf.mxu0
        %v491 = vadd.f32 %v392, %v490
        %v492 = vpop.f32.mrf.mxu0
        %493 = vmatprep.mubr.f32.mxu0 0.0
        %494 = vmatmul.mubr.f32.gmra.mxu0 %v362
        %v495 = vpop.f32.mrf.mxu0
        %v496 = vadd.f32 %v392, %v495
        %v497 = vpop.f32.mrf.mxu0
        %498 = vmatprep.mubr.f32.mxu0 0.0
        %499 = vmatmul.mubr.f32.gmra.mxu0 %v363
        %v500 = vpop.f32.mrf.mxu0
        %v501 = vadd.f32 %v392, %v500
        %v502 = vpop.f32.mrf.mxu0
        %503 = vmatprep.mubr.f32.mxu0 0.0
        %504 = vmatmul.mubr.f32.gmra.mxu0 %v364
        %v505 = vpop.f32.mrf.mxu0
        %v506 = vadd.f32 %v392, %v505
        %v507 = vpop.f32.mrf.mxu0
        %508 = vmatprep.mubr.f32.mxu0 0.0
        %509 = vmatmul.mubr.f32.gmra.mxu0 %v365
        %v510 = vpop.f32.mrf.mxu0
        %v511 = vadd.f32 %v392, %v510
        %v512 = vpop.f32.mrf.mxu0
        %513 = vmatprep.mubr.f32.mxu0 0.0
        %514 = vmatmul.mubr.f32.gmra.mxu0 %v366
        %v515 = vpop.f32.mrf.mxu0
        %v516 = vadd.f32 %v392, %v515
        %v517 = vpop.f32.mrf.mxu0
        %518 = vmatprep.mubr.f32.mxu0 0.0
        %519 = vmatmul.mubr.f32.gmra.mxu0 %v367
        %v520 = vpop.f32.mrf.mxu0
        %v521 = vadd.f32 %v392, %v520
        %v522 = vpop.f32.mrf.mxu0
        %523 = vmatprep.mubr.f32.mxu0 0.0
        %524 = vmatmul.mubr.f32.gmra.mxu0 %v368
        %v525 = vpop.f32.mrf.mxu0
        %v526 = vadd.f32 %v392, %v525
        %v527 = vpop.f32.mrf.mxu0
        %528 = vmatprep.mubr.f32.mxu0 0.0
        %529 = vmatmul.mubr.f32.gmra.mxu0 %v369
        %v530 = vpop.f32.mrf.mxu0
        %v531 = vadd.f32 %v392, %v530
        %v532 = vpop.f32.mrf.mxu0
        %533 = vmatprep.mubr.f32.mxu0 0.0
        %534 = vmatmul.mubr.f32.gmra.mxu0 %v370
        %v535 = vpop.f32.mrf.mxu0
        %v536 = vadd.f32 %v392, %v535
        %v537 = vpop.f32.mrf.mxu0
        %538 = vdwg.mxu0
        %v539 = vmax.f32 %v461, 0.0
        %v540 = vmax.f32 %v466, 0.0
        %v541 = vmax.f32 %v471, 0.0
        %v542 = vmax.f32 %v476, 0.0
        %v543 = vmax.f32 %v481, 0.0
        %v544 = vmax.f32 %v486, 0.0
        %v545 = vmax.f32 %v491, 0.0
        %v546 = vmax.f32 %v496, 0.0
        %v547 = vmax.f32 %v501, 0.0
        %v548 = vmax.f32 %v506, 0.0
        %v549 = vmax.f32 %v511, 0.0
        %v550 = vmax.f32 %v516, 0.0
        %v551 = vmax.f32 %v521, 0.0
        %v552 = vmax.f32 %v526, 0.0
        %v553 = vmax.f32 %v531, 0.0
        %v554 = vmax.f32 %v536, 0.0
        %v555 = vld [vmem:[%s3] sm:$0xff]
        %v556 = vld [vmem:[%s3 + $0x8] sm:$0xff]
        %v557 = vld [vmem:[%s3 + $0x10] sm:$0xff]
        %v558 = vld [vmem:[%s3 + $0x18] sm:$0xff]
        %v559 = vld [vmem:[%s4] sm:$0x1]
        %v561 = vlaneseq
        %v562 = vshrl.u32 %v561, 7
        %v563 = vsub.s32 0, %v562
        %v564 = vrot.slane %v559, %v563
        %vm566 = vcmask 261120
        %v568 = vsel %vm566, %v539, 0
        %v571 = vsel %vm566, %v540, 0
        %v574 = vsel %vm566, %v541, 0
        %v577 = vsel %vm566, %v542, 0
        %v580 = vsel %vm566, %v543, 0
        %v583 = vsel %vm566, %v544, 0
        %v586 = vsel %vm566, %v545, 0
        %v589 = vsel %vm566, %v546, 0
        %v592 = vsel %vm566, %v547, 0
        %v595 = vsel %vm566, %v548, 0
        %v598 = vsel %vm566, %v549, 0
        %v601 = vsel %vm566, %v550, 0
        %v604 = vsel %vm566, %v551, 0
        %v607 = vsel %vm566, %v552, 0
        %v610 = vsel %vm566, %v553, 0
        %v613 = vsel %vm566, %v554, 0
        %615 = vmatprep.subr.mxu0 0.0
        %616 = vmatpush1.msra.mxu0 0.0
        %617 = vmatprep.subr.mxu0 0.0
        %618 = vmatpush1.msra.mxu0 0.0
        %619 = vmatprep.subr.mxu0 0.0
        %620 = vmatpush1.msra.mxu0 0.0
        %621 = vmatprep.subr.mxu0 0.0
        %622 = vmatpush1.msra.mxu0 0.0
        %623 = vmatprep.subr.mxu0 0.0
        %624 = vmatpush1.msra.mxu0 0.0
        %625 = vmatprep.subr.mxu0 0.0
        %626 = vmatpush1.msra.mxu0 0.0
        %627 = vmatprep.subr.mxu0 0.0
        %628 = vmatpush1.msra.mxu0 0.0
        %629 = vmatprep.subr.mxu0 0.0
        %630 = vmatpush1.msra.mxu0 0.0
        %631 = vmatprep.subr.mxu0 0.0
        %632 = vmatpush1.msra.mxu0 0.0
        %633 = vmatprep.subr.mxu0 0.0
        %634 = vmatpush1.msra.mxu0 0.0
        %635 = vmatprep.subr.mxu0 0.0
        %636 = vmatpush1.msra.mxu0 0.0
        %637 = vmatprep.subr.mxu0 0.0
        %638 = vmatpush1.msra.mxu0 0.0
        %639 = vmatprep.subr.mxu0 0.0
        %640 = vmatpush1.msra.mxu0 %v558
        %641 = vmatprep.subr.mxu0 0.0
        %642 = vmatpush1.msra.mxu0 %v557
        %643 = vmatprep.subr.mxu0 0.0
        %644 = vmatpush1.msra.mxu0 %v556
        %645 = vmatprep.subr.mxu0 0.0
        %646 = vmatpush1.msra.mxu0 %v555
        %647 = vmatprep.subr.mxu0 0.0
        %648 = vmatpush2.msra.mxu0 0.0
        %649 = vmatprep.subr.mxu0 0.0
        %650 = vmatpush2.msra.mxu0 0.0
        %651 = vmatprep.subr.mxu0 0.0
        %652 = vmatpush2.msra.mxu0 0.0
        %653 = vmatprep.subr.mxu0 0.0
        %654 = vmatpush2.msra.mxu0 0.0
        %655 = vmatprep.subr.mxu0 0.0
        %656 = vmatpush2.msra.mxu0 0.0
        %657 = vmatprep.subr.mxu0 0.0
        %658 = vmatpush2.msra.mxu0 0.0
        %659 = vmatprep.subr.mxu0 0.0
        %660 = vmatpush2.msra.mxu0 0.0
        %661 = vmatprep.subr.mxu0 0.0
        %662 = vmatpush2.msra.mxu0 0.0
        %663 = vmatprep.subr.mxu0 0.0
        %664 = vmatpush2.msra.mxu0 0.0
        %665 = vmatprep.subr.mxu0 0.0
        %666 = vmatpush2.msra.mxu0 0.0
        %667 = vmatprep.subr.mxu0 0.0
        %668 = vmatpush2.msra.mxu0 0.0
        %669 = vmatprep.subr.mxu0 0.0
        %670 = vmatpush2.msra.mxu0 0.0
        %671 = vmatprep.subr.mxu0 0.0
        %672 = vmatpush2.msra.mxu0 0.0
        %673 = vmatprep.subr.mxu0 0.0
        %674 = vmatpush2.msra.mxu0 0.0
        %675 = vmatprep.subr.mxu0 0.0
        %676 = vmatpush2.msra.mxu0 0.0
        %677 = vmatprep.subr.mxu0 0.0
        %678 = vmatpush2.msra.mxu0 0.0
        %679 = vmatprep.mubr.f32.mxu0 0.0
        %680 = vmatmul.mubr.f32.gmra.mxu0 %v568
        %v681 = vpop.f32.mrf.mxu0
        %v682 = vadd.f32 %v564, %v681
        %v683 = vpop.f32.mrf.mxu0
        %684 = vmatprep.mubr.f32.mxu0 0.0
        %685 = vmatmul.mubr.f32.gmra.mxu0 %v571
        %v686 = vpop.f32.mrf.mxu0
        %v687 = vadd.f32 %v564, %v686
        %v688 = vpop.f32.mrf.mxu0
        %689 = vmatprep.mubr.f32.mxu0 0.0
        %690 = vmatmul.mubr.f32.gmra.mxu0 %v574
        %v691 = vpop.f32.mrf.mxu0
        %v692 = vadd.f32 %v564, %v691
        %v693 = vpop.f32.mrf.mxu0
        %694 = vmatprep.mubr.f32.mxu0 0.0
        %695 = vmatmul.mubr.f32.gmra.mxu0 %v577
        %v696 = vpop.f32.mrf.mxu0
        %v697 = vadd.f32 %v564, %v696
        %v698 = vpop.f32.mrf.mxu0
        %699 = vmatprep.mubr.f32.mxu0 0.0
        %700 = vmatmul.mubr.f32.gmra.mxu0 %v580
        %v701 = vpop.f32.mrf.mxu0
        %v702 = vadd.f32 %v564, %v701
        %v703 = vpop.f32.mrf.mxu0
        %704 = vmatprep.mubr.f32.mxu0 0.0
        %705 = vmatmul.mubr.f32.gmra.mxu0 %v583
        %v706 = vpop.f32.mrf.mxu0
        %v707 = vadd.f32 %v564, %v706
        %v708 = vpop.f32.mrf.mxu0
        %709 = vmatprep.mubr.f32.mxu0 0.0
        %710 = vmatmul.mubr.f32.gmra.mxu0 %v586
        %v711 = vpop.f32.mrf.mxu0
        %v712 = vadd.f32 %v564, %v711
        %v713 = vpop.f32.mrf.mxu0
        %714 = vmatprep.mubr.f32.mxu0 0.0
        %715 = vmatmul.mubr.f32.gmra.mxu0 %v589
        %v716 = vpop.f32.mrf.mxu0
        %v717 = vadd.f32 %v564, %v716
        %v718 = vpop.f32.mrf.mxu0
        %719 = vmatprep.mubr.f32.mxu0 0.0
        %720 = vmatmul.mubr.f32.gmra.mxu0 %v592
        %v721 = vpop.f32.mrf.mxu0
        %v722 = vadd.f32 %v564, %v721
        %v723 = vpop.f32.mrf.mxu0
        %724 = vmatprep.mubr.f32.mxu0 0.0
        %725 = vmatmul.mubr.f32.gmra.mxu0 %v595
        %v726 = vpop.f32.mrf.mxu0
        %v727 = vadd.f32 %v564, %v726
        %v728 = vpop.f32.mrf.mxu0
        %729 = vmatprep.mubr.f32.mxu0 0.0
        %730 = vmatmul.mubr.f32.gmra.mxu0 %v598
        %v731 = vpop.f32.mrf.mxu0
        %v732 = vadd.f32 %v564, %v731
        %v733 = vpop.f32.mrf.mxu0
        %734 = vmatprep.mubr.f32.mxu0 0.0
        %735 = vmatmul.mubr.f32.gmra.mxu0 %v601
        %v736 = vpop.f32.mrf.mxu0
        %v737 = vadd.f32 %v564, %v736
        %v738 = vpop.f32.mrf.mxu0
        %739 = vmatprep.mubr.f32.mxu0 0.0
        %740 = vmatmul.mubr.f32.gmra.mxu0 %v604
        %v741 = vpop.f32.mrf.mxu0
        %v742 = vadd.f32 %v564, %v741
        %v743 = vpop.f32.mrf.mxu0
        %744 = vmatprep.mubr.f32.mxu0 0.0
        %745 = vmatmul.mubr.f32.gmra.mxu0 %v607
        %v746 = vpop.f32.mrf.mxu0
        %v747 = vadd.f32 %v564, %v746
        %v748 = vpop.f32.mrf.mxu0
        %749 = vmatprep.mubr.f32.mxu0 0.0
        %750 = vmatmul.mubr.f32.gmra.mxu0 %v610
        %v751 = vpop.f32.mrf.mxu0
        %v752 = vadd.f32 %v564, %v751
        %v753 = vpop.f32.mrf.mxu0
        %754 = vmatprep.mubr.f32.mxu0 0.0
        %755 = vmatmul.mubr.f32.gmra.mxu0 %v613
        %v756 = vpop.f32.mrf.mxu0
        %v757 = vadd.f32 %v564, %v756
        %v758 = vpop.f32.mrf.mxu0
        %759 = vdwg.mxu0
        %v760 = vmax.f32 %v682, 0.0
        %v761 = vmax.f32 %v687, 0.0
        %v762 = vmax.f32 %v692, 0.0
        %v763 = vmax.f32 %v697, 0.0
        %v764 = vmax.f32 %v702, 0.0
        %v765 = vmax.f32 %v707, 0.0
        %v766 = vmax.f32 %v712, 0.0
        %v767 = vmax.f32 %v717, 0.0
        %v768 = vmax.f32 %v722, 0.0
        %v769 = vmax.f32 %v727, 0.0
        %v770 = vmax.f32 %v732, 0.0
        %v771 = vmax.f32 %v737, 0.0
        %v772 = vmax.f32 %v742, 0.0
        %v773 = vmax.f32 %v747, 0.0
        %v774 = vmax.f32 %v752, 0.0
        %v775 = vmax.f32 %v757, 0.0
        %v776 = vld [vmem:[%s5] sm:$0xff]
        %v777 = vld [vmem:[%s5 + $0x8] sm:$0xff]
        %v778 = vld [vmem:[%s6] sm:$0x1]
        %v780 = vlaneseq
        %v781 = vshrl.u32 %v780, 7
        %v782 = vsub.s32 0, %v781
        %v783 = vrot.slane %v778, %v782
        %vm785 = vcmask 130048
        %v787 = vsel %vm785, %v760, 0
        %v790 = vsel %vm785, %v761, 0
        %v793 = vsel %vm785, %v762, 0
        %v796 = vsel %vm785, %v763, 0
        %v799 = vsel %vm785, %v764, 0
        %v802 = vsel %vm785, %v765, 0
        %v805 = vsel %vm785, %v766, 0
        %v808 = vsel %vm785, %v767, 0
        %v811 = vsel %vm785, %v768, 0
        %v814 = vsel %vm785, %v769, 0
        %v817 = vsel %vm785, %v770, 0
        %v820 = vsel %vm785, %v771, 0
        %v823 = vsel %vm785, %v772, 0
        %v826 = vsel %vm785, %v773, 0
        %v829 = vsel %vm785, %v774, 0
        %v832 = vsel %vm785, %v775, 0
        %834 = vmatprep.subr.mxu0 0.0
        %835 = vmatpush1.msra.mxu0 0.0
        %836 = vmatprep.subr.mxu0 0.0
        %837 = vmatpush1.msra.mxu0 0.0
        %838 = vmatprep.subr.mxu0 0.0
        %839 = vmatpush1.msra.mxu0 0.0
        %840 = vmatprep.subr.mxu0 0.0
        %841 = vmatpush1.msra.mxu0 0.0
        %842 = vmatprep.subr.mxu0 0.0
        %843 = vmatpush1.msra.mxu0 0.0
        %844 = vmatprep.subr.mxu0 0.0
        %845 = vmatpush1.msra.mxu0 0.0
        %846 = vmatprep.subr.mxu0 0.0
        %847 = vmatpush1.msra.mxu0 0.0
        %848 = vmatprep.subr.mxu0 0.0
        %849 = vmatpush1.msra.mxu0 0.0
        %850 = vmatprep.subr.mxu0 0.0
        %851 = vmatpush1.msra.mxu0 0.0
        %852 = vmatprep.subr.mxu0 0.0
        %853 = vmatpush1.msra.mxu0 0.0
        %854 = vmatprep.subr.mxu0 0.0
        %855 = vmatpush1.msra.mxu0 0.0
        %856 = vmatprep.subr.mxu0 0.0
        %857 = vmatpush1.msra.mxu0 0.0
        %858 = vmatprep.subr.mxu0 0.0
        %859 = vmatpush1.msra.mxu0 0.0
        %860 = vmatprep.subr.mxu0 0.0
        %861 = vmatpush1.msra.mxu0 0.0
        %862 = vmatprep.subr.mxu0 0.0
        %863 = vmatpush1.msra.mxu0 %v777
        %864 = vmatprep.subr.mxu0 0.0
        %865 = vmatpush1.msra.mxu0 %v776
        %866 = vmatprep.subr.mxu0 0.0
        %867 = vmatpush2.msra.mxu0 0.0
        %868 = vmatprep.subr.mxu0 0.0
        %869 = vmatpush2.msra.mxu0 0.0
        %870 = vmatprep.subr.mxu0 0.0
        %871 = vmatpush2.msra.mxu0 0.0
        %872 = vmatprep.subr.mxu0 0.0
        %873 = vmatpush2.msra.mxu0 0.0
        %874 = vmatprep.subr.mxu0 0.0
        %875 = vmatpush2.msra.mxu0 0.0
        %876 = vmatprep.subr.mxu0 0.0
        %877 = vmatpush2.msra.mxu0 0.0
        %878 = vmatprep.subr.mxu0 0.0
        %879 = vmatpush2.msra.mxu0 0.0
        %880 = vmatprep.subr.mxu0 0.0
        %881 = vmatpush2.msra.mxu0 0.0
        %882 = vmatprep.subr.mxu0 0.0
        %883 = vmatpush2.msra.mxu0 0.0
        %884 = vmatprep.subr.mxu0 0.0
        %885 = vmatpush2.msra.mxu0 0.0
        %886 = vmatprep.subr.mxu0 0.0
        %887 = vmatpush2.msra.mxu0 0.0
        %888 = vmatprep.subr.mxu0 0.0
        %889 = vmatpush2.msra.mxu0 0.0
        %890 = vmatprep.subr.mxu0 0.0
        %891 = vmatpush2.msra.mxu0 0.0
        %892 = vmatprep.subr.mxu0 0.0
        %893 = vmatpush2.msra.mxu0 0.0
        %894 = vmatprep.subr.mxu0 0.0
        %895 = vmatpush2.msra.mxu0 0.0
        %896 = vmatprep.subr.mxu0 0.0
        %897 = vmatpush2.msra.mxu0 0.0
        %898 = vmatprep.mubr.f32.mxu0 0.0
        %899 = vmatmul.mubr.f32.gmra.mxu0 %v787
        %v900 = vpop.f32.mrf.mxu0
        %v901 = vadd.f32 %v783, %v900
        %v902 = vpop.f32.mrf.mxu0
        %903 = vmatprep.mubr.f32.mxu0 0.0
        %904 = vmatmul.mubr.f32.gmra.mxu0 %v790
        %v905 = vpop.f32.mrf.mxu0
        %v906 = vadd.f32 %v783, %v905
        %v907 = vpop.f32.mrf.mxu0
        %908 = vmatprep.mubr.f32.mxu0 0.0
        %909 = vmatmul.mubr.f32.gmra.mxu0 %v793
        %v910 = vpop.f32.mrf.mxu0
        %v911 = vadd.f32 %v783, %v910
        %v912 = vpop.f32.mrf.mxu0
        %913 = vmatprep.mubr.f32.mxu0 0.0
        %914 = vmatmul.mubr.f32.gmra.mxu0 %v796
        %v915 = vpop.f32.mrf.mxu0
        %v916 = vadd.f32 %v783, %v915
        %v917 = vpop.f32.mrf.mxu0
        %918 = vmatprep.mubr.f32.mxu0 0.0
        %919 = vmatmul.mubr.f32.gmra.mxu0 %v799
        %v920 = vpop.f32.mrf.mxu0
        %v921 = vadd.f32 %v783, %v920
        %v922 = vpop.f32.mrf.mxu0
        %923 = vmatprep.mubr.f32.mxu0 0.0
        %924 = vmatmul.mubr.f32.gmra.mxu0 %v802
        %v925 = vpop.f32.mrf.mxu0
        %v926 = vadd.f32 %v783, %v925
        %v927 = vpop.f32.mrf.mxu0
        %928 = vmatprep.mubr.f32.mxu0 0.0
        %929 = vmatmul.mubr.f32.gmra.mxu0 %v805
        %v930 = vpop.f32.mrf.mxu0
        %v931 = vadd.f32 %v783, %v930
        %v932 = vpop.f32.mrf.mxu0
        %933 = vmatprep.mubr.f32.mxu0 0.0
        %934 = vmatmul.mubr.f32.gmra.mxu0 %v808
        %v935 = vpop.f32.mrf.mxu0
        %v936 = vadd.f32 %v783, %v935
        %v937 = vpop.f32.mrf.mxu0
        %938 = vmatprep.mubr.f32.mxu0 0.0
        %939 = vmatmul.mubr.f32.gmra.mxu0 %v811
        %v940 = vpop.f32.mrf.mxu0
        %v941 = vadd.f32 %v783, %v940
        %v942 = vpop.f32.mrf.mxu0
        %943 = vmatprep.mubr.f32.mxu0 0.0
        %944 = vmatmul.mubr.f32.gmra.mxu0 %v814
        %v945 = vpop.f32.mrf.mxu0
        %v946 = vadd.f32 %v783, %v945
        %v947 = vpop.f32.mrf.mxu0
        %948 = vmatprep.mubr.f32.mxu0 0.0
        %949 = vmatmul.mubr.f32.gmra.mxu0 %v817
        %v950 = vpop.f32.mrf.mxu0
        %v951 = vadd.f32 %v783, %v950
        %v952 = vpop.f32.mrf.mxu0
        %953 = vmatprep.mubr.f32.mxu0 0.0
        %954 = vmatmul.mubr.f32.gmra.mxu0 %v820
        %v955 = vpop.f32.mrf.mxu0
        %v956 = vadd.f32 %v783, %v955
        %v957 = vpop.f32.mrf.mxu0
        %958 = vmatprep.mubr.f32.mxu0 0.0
        %959 = vmatmul.mubr.f32.gmra.mxu0 %v823
        %v960 = vpop.f32.mrf.mxu0
        %v961 = vadd.f32 %v783, %v960
        %v962 = vpop.f32.mrf.mxu0
        %963 = vmatprep.mubr.f32.mxu0 0.0
        %964 = vmatmul.mubr.f32.gmra.mxu0 %v826
        %v965 = vpop.f32.mrf.mxu0
        %v966 = vadd.f32 %v783, %v965
        %v967 = vpop.f32.mrf.mxu0
        %968 = vmatprep.mubr.f32.mxu0 0.0
        %969 = vmatmul.mubr.f32.gmra.mxu0 %v829
        %v970 = vpop.f32.mrf.mxu0
        %v971 = vadd.f32 %v783, %v970
        %v972 = vpop.f32.mrf.mxu0
        %973 = vmatprep.mubr.f32.mxu0 0.0
        %974 = vmatmul.mubr.f32.gmra.mxu0 %v832
        %v975 = vpop.f32.mrf.mxu0
        %v976 = vadd.f32 %v783, %v975
        %v977 = vpop.f32.mrf.mxu0
        %978 = vdwg.mxu0
        %v979 = vmax.f32 %v901, 0.0
        %v980 = vmax.f32 %v906, 0.0
        %v981 = vmax.f32 %v911, 0.0
        %v982 = vmax.f32 %v916, 0.0
        %v983 = vmax.f32 %v921, 0.0
        %v984 = vmax.f32 %v926, 0.0
        %v985 = vmax.f32 %v931, 0.0
        %v986 = vmax.f32 %v936, 0.0
        %v987 = vmax.f32 %v941, 0.0
        %v988 = vmax.f32 %v946, 0.0
        %v989 = vmax.f32 %v951, 0.0
        %v990 = vmax.f32 %v956, 0.0
        %v991 = vmax.f32 %v961, 0.0
        %v992 = vmax.f32 %v966, 0.0
        %v993 = vmax.f32 %v971, 0.0
        %v994 = vmax.f32 %v976, 0.0
        %v995 = vld [vmem:[%s7] sm:$0xff]
        %v996 = vld [vmem:[%s8] sm:$0x1]
        %v998 = vlaneseq
        %v999 = vshrl.u32 %v998, 7
        %v1000 = vsub.s32 0, %v999
        %v1001 = vrot.slane %v996, %v1000
        %vm1003 = vcmask 64512
        %v1005 = vsel %vm1003, %v979, 0
        %v1008 = vsel %vm1003, %v980, 0
        %v1011 = vsel %vm1003, %v981, 0
        %v1014 = vsel %vm1003, %v982, 0
        %v1017 = vsel %vm1003, %v983, 0
        %v1020 = vsel %vm1003, %v984, 0
        %v1023 = vsel %vm1003, %v985, 0
        %v1026 = vsel %vm1003, %v986, 0
        %v1029 = vsel %vm1003, %v987, 0
        %v1032 = vsel %vm1003, %v988, 0
        %v1035 = vsel %vm1003, %v989, 0
        %v1038 = vsel %vm1003, %v990, 0
        %v1041 = vsel %vm1003, %v991, 0
        %v1044 = vsel %vm1003, %v992, 0
        %v1047 = vsel %vm1003, %v993, 0
        %v1050 = vsel %vm1003, %v994, 0
        %1052 = vmatprep.subr.mxu0 0.0
        %1053 = vmatpush1.msra.mxu0 0.0
        %1054 = vmatprep.subr.mxu0 0.0
        %1055 = vmatpush1.msra.mxu0 0.0
        %1056 = vmatprep.subr.mxu0 0.0
        %1057 = vmatpush1.msra.mxu0 0.0
        %1058 = vmatprep.subr.mxu0 0.0
        %1059 = vmatpush1.msra.mxu0 0.0
        %1060 = vmatprep.subr.mxu0 0.0
        %1061 = vmatpush1.msra.mxu0 0.0
        %1062 = vmatprep.subr.mxu0 0.0
        %1063 = vmatpush1.msra.mxu0 0.0
        %1064 = vmatprep.subr.mxu0 0.0
        %1065 = vmatpush1.msra.mxu0 0.0
        %1066 = vmatprep.subr.mxu0 0.0
        %1067 = vmatpush1.msra.mxu0 0.0
        %1068 = vmatprep.subr.mxu0 0.0
        %1069 = vmatpush1.msra.mxu0 0.0
        %1070 = vmatprep.subr.mxu0 0.0
        %1071 = vmatpush1.msra.mxu0 0.0
        %1072 = vmatprep.subr.mxu0 0.0
        %1073 = vmatpush1.msra.mxu0 0.0
        %1074 = vmatprep.subr.mxu0 0.0
        %1075 = vmatpush1.msra.mxu0 0.0
        %1076 = vmatprep.subr.mxu0 0.0
        %1077 = vmatpush1.msra.mxu0 0.0
        %1078 = vmatprep.subr.mxu0 0.0
        %1079 = vmatpush1.msra.mxu0 0.0
        %1080 = vmatprep.subr.mxu0 0.0
        %1081 = vmatpush1.msra.mxu0 0.0
        %1082 = vmatprep.subr.mxu0 0.0
        %1083 = vmatpush1.msra.mxu0 %v995
        %1084 = vmatprep.subr.mxu0 0.0
        %1085 = vmatpush2.msra.mxu0 0.0
        %1086 = vmatprep.subr.mxu0 0.0
        %1087 = vmatpush2.msra.mxu0 0.0
        %1088 = vmatprep.subr.mxu0 0.0
        %1089 = vmatpush2.msra.mxu0 0.0
        %1090 = vmatprep.subr.mxu0 0.0
        %1091 = vmatpush2.msra.mxu0 0.0
        %1092 = vmatprep.subr.mxu0 0.0
        %1093 = vmatpush2.msra.mxu0 0.0
        %1094 = vmatprep.subr.mxu0 0.0
        %1095 = vmatpush2.msra.mxu0 0.0
        %1096 = vmatprep.subr.mxu0 0.0
        %1097 = vmatpush2.msra.mxu0 0.0
        %1098 = vmatprep.subr.mxu0 0.0
        %1099 = vmatpush2.msra.mxu0 0.0
        %1100 = vmatprep.subr.mxu0 0.0
        %1101 = vmatpush2.msra.mxu0 0.0
        %1102 = vmatprep.subr.mxu0 0.0
        %1103 = vmatpush2.msra.mxu0 0.0
        %1104 = vmatprep.subr.mxu0 0.0
        %1105 = vmatpush2.msra.mxu0 0.0
        %1106 = vmatprep.subr.mxu0 0.0
        %1107 = vmatpush2.msra.mxu0 0.0
        %1108 = vmatprep.subr.mxu0 0.0
        %1109 = vmatpush2.msra.mxu0 0.0
        %1110 = vmatprep.subr.mxu0 0.0
        %1111 = vmatpush2.msra.mxu0 0.0
        %1112 = vmatprep.subr.mxu0 0.0
        %1113 = vmatpush2.msra.mxu0 0.0
        %1114 = vmatprep.subr.mxu0 0.0
        %1115 = vmatpush2.msra.mxu0 0.0
        %1116 = vmatprep.mubr.f32.mxu0 0.0
        %1117 = vmatmul.mubr.f32.gmra.mxu0 %v1005
        %v1118 = vpop.f32.mrf.mxu0
        %v1119 = vadd.f32 %v1001, %v1118
        %v1120 = vpop.f32.mrf.mxu0
        %1121 = vmatprep.mubr.f32.mxu0 0.0
        %1122 = vmatmul.mubr.f32.gmra.mxu0 %v1008
        %v1123 = vpop.f32.mrf.mxu0
        %v1124 = vadd.f32 %v1001, %v1123
        %v1125 = vpop.f32.mrf.mxu0
        %1126 = vmatprep.mubr.f32.mxu0 0.0
        %1127 = vmatmul.mubr.f32.gmra.mxu0 %v1011
        %v1128 = vpop.f32.mrf.mxu0
        %v1129 = vadd.f32 %v1001, %v1128
        %v1130 = vpop.f32.mrf.mxu0
        %1131 = vmatprep.mubr.f32.mxu0 0.0
        %1132 = vmatmul.mubr.f32.gmra.mxu0 %v1014
        %v1133 = vpop.f32.mrf.mxu0
        %v1134 = vadd.f32 %v1001, %v1133
        %v1135 = vpop.f32.mrf.mxu0
        %1136 = vmatprep.mubr.f32.mxu0 0.0
        %1137 = vmatmul.mubr.f32.gmra.mxu0 %v1017
        %v1138 = vpop.f32.mrf.mxu0
        %v1139 = vadd.f32 %v1001, %v1138
        %v1140 = vpop.f32.mrf.mxu0
        %1141 = vmatprep.mubr.f32.mxu0 0.0
        %1142 = vmatmul.mubr.f32.gmra.mxu0 %v1020
        %v1143 = vpop.f32.mrf.mxu0
        %v1144 = vadd.f32 %v1001, %v1143
        %v1145 = vpop.f32.mrf.mxu0
        %1146 = vmatprep.mubr.f32.mxu0 0.0
        %1147 = vmatmul.mubr.f32.gmra.mxu0 %v1023
        %v1148 = vpop.f32.mrf.mxu0
        %v1149 = vadd.f32 %v1001, %v1148
        %v1150 = vpop.f32.mrf.mxu0
        %1151 = vmatprep.mubr.f32.mxu0 0.0
        %1152 = vmatmul.mubr.f32.gmra.mxu0 %v1026
        %v1153 = vpop.f32.mrf.mxu0
        %v1154 = vadd.f32 %v1001, %v1153
        %v1155 = vpop.f32.mrf.mxu0
        %1156 = vmatprep.mubr.f32.mxu0 0.0
        %1157 = vmatmul.mubr.f32.gmra.mxu0 %v1029
        %v1158 = vpop.f32.mrf.mxu0
        %v1159 = vadd.f32 %v1001, %v1158
        %v1160 = vpop.f32.mrf.mxu0
        %1161 = vmatprep.mubr.f32.mxu0 0.0
        %1162 = vmatmul.mubr.f32.gmra.mxu0 %v1032
        %v1163 = vpop.f32.mrf.mxu0
        %v1164 = vadd.f32 %v1001, %v1163
        %v1165 = vpop.f32.mrf.mxu0
        %1166 = vmatprep.mubr.f32.mxu0 0.0
        %1167 = vmatmul.mubr.f32.gmra.mxu0 %v1035
        %v1168 = vpop.f32.mrf.mxu0
        %v1169 = vadd.f32 %v1001, %v1168
        %v1170 = vpop.f32.mrf.mxu0
        %1171 = vmatprep.mubr.f32.mxu0 0.0
        %1172 = vmatmul.mubr.f32.gmra.mxu0 %v1038
        %v1173 = vpop.f32.mrf.mxu0
        %v1174 = vadd.f32 %v1001, %v1173
        %v1175 = vpop.f32.mrf.mxu0
        %1176 = vmatprep.mubr.f32.mxu0 0.0
        %1177 = vmatmul.mubr.f32.gmra.mxu0 %v1041
        %v1178 = vpop.f32.mrf.mxu0
        %v1179 = vadd.f32 %v1001, %v1178
        %v1180 = vpop.f32.mrf.mxu0
        %1181 = vmatprep.mubr.f32.mxu0 0.0
        %1182 = vmatmul.mubr.f32.gmra.mxu0 %v1044
        %v1183 = vpop.f32.mrf.mxu0
        %v1184 = vadd.f32 %v1001, %v1183
        %v1185 = vpop.f32.mrf.mxu0
        %1186 = vmatprep.mubr.f32.mxu0 0.0
        %1187 = vmatmul.mubr.f32.gmra.mxu0 %v1047
        %v1188 = vpop.f32.mrf.mxu0
        %v1189 = vadd.f32 %v1001, %v1188
        %v1190 = vpop.f32.mrf.mxu0
        %1191 = vmatprep.mubr.f32.mxu0 0.0
        %1192 = vmatmul.mubr.f32.gmra.mxu0 %v1050
        %v1193 = vpop.f32.mrf.mxu0
        %v1194 = vadd.f32 %v1001, %v1193
        %v1195 = vpop.f32.mrf.mxu0
        %1196 = vdwg.mxu0
        %vm1197 = vcmask 31744
        %1198 = vst.msk [vmem:[%s353] sm:$0xff] %vm1197, %v1119
        %1199 = vst.msk [vmem:[%s353 + $0x8] sm:$0xff] %vm1197, %v1124
        %1200 = vst.msk [vmem:[%s353 + $0x10] sm:$0xff] %vm1197, %v1129
        %1201 = vst.msk [vmem:[%s353 + $0x18] sm:$0xff] %vm1197, %v1134
        %1202 = vst.msk [vmem:[%s353 + $0x20] sm:$0xff] %vm1197, %v1139
        %1203 = vst.msk [vmem:[%s353 + $0x28] sm:$0xff] %vm1197, %v1144
        %1204 = vst.msk [vmem:[%s353 + $0x30] sm:$0xff] %vm1197, %v1149
        %1205 = vst.msk [vmem:[%s353 + $0x38] sm:$0xff] %vm1197, %v1154
        %1206 = vst.msk [vmem:[%s353 + $0x40] sm:$0xff] %vm1197, %v1159
        %1207 = vst.msk [vmem:[%s353 + $0x48] sm:$0xff] %vm1197, %v1164
        %1208 = vst.msk [vmem:[%s353 + $0x50] sm:$0xff] %vm1197, %v1169
        %1209 = vst.msk [vmem:[%s353 + $0x58] sm:$0xff] %vm1197, %v1174
        %1210 = vst.msk [vmem:[%s353 + $0x60] sm:$0xff] %vm1197, %v1179
        %1211 = vst.msk [vmem:[%s353 + $0x68] sm:$0xff] %vm1197, %v1184
        %1212 = vst.msk [vmem:[%s353 + $0x70] sm:$0xff] %vm1197, %v1189
        %1213 = vst.msk [vmem:[%s353 + $0x78] sm:$0xff] %vm1197, %v1194
        %s1214 = smul.u32 16, %s23
        %p1215 = scmp.lt.s32.totalorder %s1214, 31
        %s1216 = scalar_select %p1215, %s1214, 31
        %s1217 = smul.addr %s1216, 8
        %s1218 = scalar_lea.vmem %s9, %s1217
        // Predicated region
        $region61: #{tpu_custom_call.1} parent=55 // pred_check
          %p1219 = pneg %p235
        $region62: #{tpu_custom_call.1} parent=55 // pred_check_branch
          %1221 = sbr.rel (%p1219) target = $region64
        $region63: #{tpu_custom_call.1} parent=55 // pred_region
          %s1222 = smul.u32 16, %s23
        $region64: #{tpu_custom_call.1} parent=55 // pred_fallthru
          _
      $region56: #{tpu_custom_call.1} parent=5 // pred_fallthru
        _
      %p1223 = scmp.le.s32.totalorder 2, %s18
      // Predicated region
      $region65: #{tpu_custom_call.1} parent=5 // pred_check
        %p1224 = pneg %p1223
      $region66: #{tpu_custom_call.1} parent=5 // pred_check_branch
        %1226 = sbr.rel (%p1224) target = $region68
      $region67: #{tpu_custom_call.1} parent=5 // pred_region
        %s1227 = ssub.s32 %s18, 2
        // Predicated region
        $region69: #{tpu_custom_call.1} parent=67 // pred_check
          %p1228 = pneg %p241
        $region70: #{tpu_custom_call.1} parent=67 // pred_check_branch
          %1230 = sbr.rel (%p1228) target = $region72
        $region71: #{tpu_custom_call.1} parent=67 // pred_region
          %s1231 = smul.u32 16, %s24
          %p1232 = scmp.lt.s32.totalorder %s1231, 31
          %s1233 = scalar_select %p1232, %s1231, 31
          %s1234 = smul.addr %s1233, 8
          %s1235 = scalar_lea.vmem %s9, %s1234
        $region72: #{tpu_custom_call.1} parent=67 // pred_fallthru
          _
      $region68: #{tpu_custom_call.1} parent=5 // pred_fallthru
        _
    $region6: #{tpu_custom_call.1} parent=1 // loop_footer
      %s22 = sadd.s32 1, %s18
    $region7: #{tpu_custom_call.1} parent=1 // loop_footer_branch
      %17 = sbr.rel target = $region3
    $region8: #{tpu_custom_call.1} parent=1 // loop_exit
      _
    %1236 = vsyncpa [#allocation3], 1
    %s1237 = scalar_lea.sflag [#allocation3], 1
    %1238 = vsyncpa %s1237, 1

</llo_original>
